<compile_context>
chip_gen: v7x
topology: tpu7x:2x2x1
jax: 0.10.0
libtpu: 0.0.40
codegen_flags: <defaults>
</compile_context>

<pallas_src>
import jax
import jax.numpy as jnp
from jax.experimental import pallas as pl
from jax.experimental.pallas import tpu as pltpu


def _poly_kernel(w_ref, x_ref, o_ref):
    # w_ref: SMEM (3,) f32 scalars [w1, w2, w3]; x_ref/o_ref: VMEM tile.
    w1 = w_ref[0]
    w2 = w_ref[1]
    w3 = w_ref[2]
    x = x_ref[...]
    # Horner form: (w1*x + w2)*x + w3  ==  w1*x^2 + w2*x + w3.
    o_ref[...] = (w1 * x + w2) * x + w3


def _vmem_budget_bytes():
    """Generation-aware scoped-VMEM budget with headroom for compiler scratch."""
    try:
        cap = int(pltpu.get_tpu_info().vmem_capacity_bytes)
    except Exception:
        cap = 64 << 20  # safe on every generation (v7x physical VMEM)
    return max(cap - (16 << 20), 32 << 20)


def _poly_2d(x2d, w, vmem_budget, target_tile_bytes):
    """Run the kernel on a lane-dense 2-D slab; tiles span the full width."""
    M, N = x2d.shape
    itemsize = jnp.dtype(x2d.dtype).itemsize

    # Row-tile size: aim for ~target_tile_bytes per tile (amortizes the fixed
    # per-grid-step overhead) while the double-buffered working set
    # (1 in + 1 out) * 2 buffers fits the VMEM budget with 8 MiB headroom.
    rows_by_target = max(target_tile_bytes // (N * itemsize), 1)
    rows_by_vmem = max((vmem_budget - (8 << 20)) // (4 * N * itemsize), 1)
    tr = int(min(M, rows_by_target, rows_by_vmem))
    if tr < M:
        tr = max((tr // 8) * 8, 8)  # sublane rule: multiple of 8 (or full dim)

    n_blocks = pl.cdiv(M, tr)
    if n_blocks < 2 and M >= 16:
        # Guarantee >=2 grid points on the parallel row axis so both v7x
        # TensorCores get work; harmless on single-TC v5e/v6e.
        tr = max(((M // 2) // 8) * 8, 8)
        n_blocks = pl.cdiv(M, tr)

    tile_bytes = tr * N * itemsize
    vmem_limit = int(min(max(4 * tile_bytes + (8 << 20), 32 << 20), vmem_budget))

    return pl.pallas_call(
        _poly_kernel,
        out_shape=jax.ShapeDtypeStruct((M, N), x2d.dtype),
        grid=(n_blocks,),
        in_specs=[
            # Whole-array SMEM operand: staged once, block index never changes.
            pl.BlockSpec(memory_space=pltpu.MemorySpace.SMEM),
            pl.BlockSpec((tr, N), lambda i: (i, 0)),
        ],
        out_specs=pl.BlockSpec((tr, N), lambda i: (i, 0)),
        compiler_params=pltpu.CompilerParams(
            dimension_semantics=("parallel",),
            vmem_limit_bytes=vmem_limit,
        ),
    )(w, x2d)


def polynomial_forward(x, w, *, target_tile_bytes=4 << 20):
    """y = w[0]*x**2 + w[1]*x + w[2], elementwise.  x: any shape, float32."""
    orig_shape = x.shape
    total = int(x.size)
    if total == 0:
        return x
    w = w.astype(jnp.float32)
    vmem_budget = _vmem_budget_bytes()

    # Flatten (row-major, contiguous) and make the slab lane-dense.  Pad by at
    # most 127 elements when total is not a multiple of 128; pad/slice/reshape
    # are XLA layout plumbing, not kernel work.
    flat = x.reshape(-1)
    pad = (-total) % 128
    if pad:
        flat = jnp.pad(flat, (0, pad))
    padded = total + pad

    lane = 128
    for cand in (4096, 2048, 1024, 512, 256):
        if padded % cand == 0:
            lane = cand
            break
    rows = padded // lane
    x2d = flat.reshape(rows, lane)

    out2d = _poly_2d(x2d, w, vmem_budget, target_tile_bytes)
    out = out2d.reshape(-1)
    if pad:
        out = out[:total]
    return out.reshape(orig_shape)


if __name__ == "__main__":
    key = jax.random.PRNGKey(0)
    kx, kw = jax.random.split(key)

    # Deterministic "parameters" matching nn.Parameter(torch.randn(1)) x3.
    w = jax.random.normal(kw, (3,), dtype=jnp.float32)  # [w1, w2, w3]

    # Shapes exercising: padded fallback (awkward size), single tile,
    # megacore split, ragged last row-block, and a 1-D input.
    shapes = [(64, 1), (8, 128), (256, 512), (520, 384), (1000,)]
    for i, shape in enumerate(shapes):
        kx_i = jax.random.fold_in(kx, i)
        x = jax.random.normal(kx_i, shape, dtype=jnp.float32)

        out = jax.block_until_ready(polynomial_forward(x, w))

        # Reference in plain JAX (same math as the PyTorch forward).
        ref = w[0] * x**2 + w[1] * x + w[2]
        assert out.shape == ref.shape, f"shape mismatch for {shape}"
        assert jnp.allclose(out, ref, atol=1e-5, rtol=1e-5), (
            f"mismatch vs reference for shape {shape}"
        )

    print("KERNEL_OK")
</pallas_src>

<mosaic_0001>
module attributes {stable_mosaic.version = 11 : i64} {
  func.func @_poly_kernel(%arg0: i32, %arg1: memref<3xf32, #tpu.memory_space<smem>>, %arg2: memref<1x128xf32, #tpu.memory_space<vmem>>, %arg3: memref<1x128xf32, #tpu.memory_space<vmem>>) attributes {dimension_semantics = [#tpu.dimension_semantics<parallel>], iteration_bounds = array<i64: 1>, scalar_prefetch = 0 : i64, scratch_operands = 0 : i64, tpu.core_type = #tpu.core_type<tc>, window_params = [{transform_indices = @transform_0, window_bounds = array<i64: 3>}, {transform_indices = @transform_1, window_bounds = array<i64: 1, 128>}, {transform_indices = @transform_2, window_bounds = array<i64: 1, 128>}]} {
    %c0 = arith.constant 0 : index
    %0 = memref.load %arg1[%c0] : memref<3xf32, #tpu.memory_space<smem>>
    %c1 = arith.constant 1 : index
    %1 = memref.load %arg1[%c1] : memref<3xf32, #tpu.memory_space<smem>>
    %c2 = arith.constant 2 : index
    %2 = memref.load %arg1[%c2] : memref<3xf32, #tpu.memory_space<smem>>
    %c0_0 = arith.constant 0 : index
    %c0_1 = arith.constant 0 : index
    %3 = vector.load %arg2[%c0_0, %c0_1] : memref<1x128xf32, #tpu.memory_space<vmem>>, vector<1x128xf32>
    %4 = vector.broadcast %0 : f32 to vector<1x128xf32>
    %5 = arith.mulf %4, %3 : vector<1x128xf32>
    %6 = vector.broadcast %1 : f32 to vector<1x128xf32>
    %7 = arith.addf %5, %6 : vector<1x128xf32>
    %8 = arith.mulf %7, %3 : vector<1x128xf32>
    %9 = vector.broadcast %2 : f32 to vector<1x128xf32>
    %10 = arith.addf %8, %9 : vector<1x128xf32>
    %c0_2 = arith.constant 0 : index
    %c0_3 = arith.constant 0 : index
    %11 = vector.load %arg3[%c0_2, %c0_3] : memref<1x128xf32, #tpu.memory_space<vmem>>, vector<1x128xf32>
    tpu.vector_store %arg3[%c0_2, %c0_3], %10 {strides = array<i32>} : memref<1x128xf32, #tpu.memory_space<vmem>>, vector<1x128xf32>,
    return
  }
  func.func @transform_0(%arg0: i32) -> i32 {
    %c0_i32 = arith.constant 0 : i32
    %c0_i32_0 = arith.constant 0 : i32
    return %c0_i32 : i32
  }
  func.func @transform_1(%arg0: i32) -> (i32, i32) {
    %c0_i32 = arith.constant 0 : i32
    %c0_i32_0 = arith.constant 0 : i32
    return %arg0, %c0_i32 : i32, i32
  }
  func.func @transform_2(%arg0: i32) -> (i32, i32) {
    %c0_i32 = arith.constant 0 : i32
    %c0_i32_0 = arith.constant 0 : i32
    return %arg0, %c0_i32 : i32, i32
  }
}

</mosaic_0001>

<llo_original>
// kernel: tpu_custom_call.1
$region0: #{tpu_custom_call.1}
  #allocation0 [shape = 'u32[]', space=smem, size = 0x4, offset = 0x4, fixed_abs, tag = 'smem constant byte address 0x4 - core index']
  #allocation1 [shape = 'u32[144,128]{1,0:T(1,128)}', space=vmem, size = 0x12000, scoped, tag = 'internal scratch']
  %s0 = inlined_call_operand.hbm [shape: f32[3], index: 0, kind: input, shape index: {}]
  %s1 = inlined_call_operand.vmem [shape: f32[1,128], index: 1, kind: input, shape index: {}]
  %s2 = inlined_call_operand.hbm [shape: f32[1,128], index: 2, kind: output, shape index: {}]
  %s3 = sld [smem:[#allocation0]]
  $region22: #{tpu_custom_call.1} parent=0
    _
  %s5 = ssub.s32 1, %s3
  %s6 = scalar_select 0, %s5, %s3
  $region1: #{tpu_custom_call.1} parent=0
    #allocation2 [shape = 'u8[512]{0}', space=smem, size = 0x200, scoped, tag = 'input window, operand 0, single buffered']
    #allocation3 [shape = 's32[1]{0}', space=sflag, size = 0x4, scoped, tag = 'scoped memory for tpu_custom_call.1']
    #allocation4 [shape = 's32[1]{0}', space=sflag, size = 0x4, scoped, tag = 'scoped memory for tpu_custom_call.1']
    #allocation5 [shape = 'u8[512]{0}', space=vmem, size = 0x400, scoped, tag = 'output window, operand 0, single buffered']
    %7 = vsyncpa [#allocation4], 0
    %8 = vsyncpa [#allocation3], 0
    // Predicated region
    $region2: #{tpu_custom_call.1} parent=1 // pred_check
      _
    $region3: #{tpu_custom_call.1} parent=1 // pred_check_branch
      %10 = sbr.rel (0) target = $region5
    $region4: #{tpu_custom_call.1} parent=1 // pred_region
      %s12 = ssub.s32 16, 16
      %13 = vsyncadd [#allocation4], %s12
      %16 = dma.hbm_to_smem %s0, 16, [#allocation2], [#allocation4]
    $region5: #{tpu_custom_call.1} parent=1 // pred_fallthru
      _
    // Predicated region
    $region6: #{tpu_custom_call.1} parent=1 // pred_check
      _
    $region7: #{tpu_custom_call.1} parent=1 // pred_check_branch
      %18 = sbr.rel (0) target = $region9
    $region8: #{tpu_custom_call.1} parent=1 // pred_region
      _
    $region9: #{tpu_custom_call.1} parent=1 // pred_fallthru
      _
    // Predicated region
    $region10: #{tpu_custom_call.1} parent=1 // pred_check
      _
    $region11: #{tpu_custom_call.1} parent=1 // pred_check_branch
      %20 = sbr.rel (0) target = $region13
    $region12: #{tpu_custom_call.1} parent=1 // pred_region
      %21 = dma.done [#allocation4], 16
    $region13: #{tpu_custom_call.1} parent=1 // pred_fallthru
      _
    %22 = sfence
    %s23 = sld [smem:[#allocation2]]
    %s24 = sld [smem:[#allocation2 + $0x1]]
    %s25 = sld [smem:[#allocation2 + $0x2]]
    %v26 = vld [vmem:[%s1] sm:$0x1]
    %v27 = vstv %s23
    %v28 = vmul.f32 %v27, %v26
    %v29 = vstv %s24
    %v30 = vadd.f32 %v28, %v29
    %v31 = vmul.f32 %v30, %v26
    %v32 = vstv %s25
    %v33 = vadd.f32 %v31, %v32
    %34 = vst [vmem:[#allocation5] sm:$0x1] %v33
    // Predicated region
    $region14: #{tpu_custom_call.1} parent=1 // pred_check
      _
    $region15: #{tpu_custom_call.1} parent=1 // pred_check_branch
      %36 = sbr.rel (0) target = $region17
    $region16: #{tpu_custom_call.1} parent=1 // pred_region
      %s38 = ssub.s32 16, 16
      %39 = vsyncadd [#allocation3], %s38
      %s41 = sshll.u32 [#allocation5], 4
      %s42 = int_to_ptr.vmem [resolvable:$true] %s41
      %44 = dma.vmem_to_hbm [thread:$0]  %s42, 16, %s2, [#allocation3]
    $region17: #{tpu_custom_call.1} parent=1 // pred_fallthru
      _
    // Predicated region
    $region18: #{tpu_custom_call.1} parent=1 // pred_check
      _
    $region19: #{tpu_custom_call.1} parent=1 // pred_check_branch
      %46 = sbr.rel (0) target = $region21
    $region20: #{tpu_custom_call.1} parent=1 // pred_region
      %47 = dma.done [#allocation3], 16
    $region21: #{tpu_custom_call.1} parent=1 // pred_fallthru
      _
    %48 = vsyncpa [#allocation3], 1
    %49 = vsyncpa [#allocation4], 1

</llo_original>
